<compile_context>
chip_gen: v6e
topology: v6e:2x2x1
jax: 0.10.0
libtpu: 0.0.40
codegen_flags: <defaults>
</compile_context>

<pallas_src>
import math

import jax
import jax.numpy as jnp
from jax.experimental import pallas as pl
from jax.experimental.pallas import tpu as pltpu


def _cdiv(a, b):
    return -(-a // b)


def _drop_path_kernel(scale_ref, x_ref, o_ref):
    # scale_ref: (B,) float32 in SMEM (scalar prefetch): 0.0 (dropped) or
    #            1/keep_prob (kept) for each sample.
    # x_ref / o_ref: (1, TILE_R, LANE) VMEM tile of the current sample.
    b = pl.program_id(0)
    s = scale_ref[b].astype(x_ref.dtype)
    o_ref[...] = x_ref[...] * s


def _drop_path_add_kernel(scale_ref, x_ref, r_ref, o_ref):
    # Fused residual add: out = residual + scale * x (one HBM pass for the
    # whole residual-branch epilogue instead of DropPath + separate add).
    b = pl.program_id(0)
    s = scale_ref[b].astype(x_ref.dtype)
    o_ref[...] = r_ref[...] + x_ref[...] * s


def _pick_lane(n):
    """Widest lane dim (multiple of 128) that divides the per-sample size."""
    for lane in (512, 256, 128):
        if n % lane == 0:
            return lane
    return None


def _pick_tile_rows(rows, lane, itemsize, n_tensors, batch):
    """Sublane-aligned row tile (~4 MiB blocks), used with a cdiv grid."""
    sub = max(8, 32 // itemsize)            # 8 (f32) / 16 (bf16) / 32 (int8)
    # ~4 MiB per block; keep n_tensors double-buffered blocks under ~28 MiB so
    # the explicit 32 MiB vmem limit has headroom on every chip generation.
    target_bytes = min(4 << 20, (28 << 20) // (2 * n_tensors))
    tile = max(sub, (target_bytes // (lane * itemsize)) // sub * sub)
    # Keep at least ~4 blocks across the two "parallel" grid axes so v7x's two
    # TensorCores both get work on medium-sized tensors.
    if batch * _cdiv(rows, tile) < 4:
        want_blocks = _cdiv(4, batch)
        tile = min(tile, max(sub, (_cdiv(rows, want_blocks)) // sub * sub))
    if tile >= rows:
        return rows                          # block dim == full dim: legal
    return tile                              # ragged last block handled by cdiv


def drop_path_pallas(x, drop_prob: float, training: bool, key, residual=None):
    """Pallas TPU equivalent of timm's drop_path(x, drop_prob, training).

    If `residual` is given, returns residual + drop_path(x) fused in one pass.
    """
    if not drop_prob or not training:
        return x if residual is None else x + residual

    keep_prob = 1.0 - float(drop_prob)
    B = x.shape[0]
    orig_shape = x.shape
    n = math.prod(orig_shape[1:])

    # Per-sample keep decision: floor(keep_prob + U[0,1)), as in the PyTorch
    # reference. Precompute the final scale in f32 for scalar prefetch.
    u = jax.random.uniform(key, (B,), dtype=jnp.float32)
    mask = jnp.floor(keep_prob + u)                       # 0.0 or 1.0
    scale = (mask * (1.0 / keep_prob)).astype(jnp.float32)

    flat_x = x.reshape(B, n)
    flat_r = residual.reshape(B, n) if residual is not None else None
    lane = _pick_lane(n)
    padded = False
    if lane is None:
        # TODO(synk): handle the ragged tail with an in-kernel masked store
        # (pltpu.store(..., mask=...)) instead of pad + slice (extra HBM round
        # trip); conv/ViT feature maps essentially never hit this path.
        lane = 128
        pad = (-n) % lane
        flat_x = jnp.pad(flat_x, ((0, 0), (0, pad)))
        if flat_r is not None:
            flat_r = jnp.pad(flat_r, ((0, 0), (0, pad)))
        padded = True
    rows = flat_x.shape[1] // lane
    xr = flat_x.reshape(B, rows, lane)
    rr = flat_r.reshape(B, rows, lane) if flat_r is not None else None

    itemsize = jnp.dtype(x.dtype).itemsize
    n_tensors = 2 if residual is None else 3              # in(+resid) + out
    tile_r = _pick_tile_rows(rows, lane, itemsize, n_tensors, B)
    grid = (B, _cdiv(rows, tile_r))

    spec = pl.BlockSpec((1, tile_r, lane), lambda b, r, s: (b, r, 0))
    compiler_params = pltpu.CompilerParams(
        dimension_semantics=("parallel", "parallel"),
        # 4 MiB blocks x double-buffer x 2-3 tensors needs more than v5e's
        # 16 MiB scoped default; 32 MiB is legal on v5e/v6e/v7x alike.
        vmem_limit_bytes=32 * 1024 * 1024,
    )

    if residual is None:
        out = pl.pallas_call(
            _drop_path_kernel,
            out_shape=jax.ShapeDtypeStruct(xr.shape, x.dtype),
            grid_spec=pltpu.PrefetchScalarGridSpec(
                num_scalar_prefetch=1,
                grid=grid,
                in_specs=[spec],
                out_specs=spec,
            ),
            compiler_params=compiler_params,
            # Args are (scale, xr); alias the tensor input to the output so
            # the scale can happen in place when the buffer is donated.
            input_output_aliases={1: 0},
        )(scale, xr)
    else:
        out = pl.pallas_call(
            _drop_path_add_kernel,
            out_shape=jax.ShapeDtypeStruct(xr.shape, x.dtype),
            grid_spec=pltpu.PrefetchScalarGridSpec(
                num_scalar_prefetch=1,
                grid=grid,
                in_specs=[spec, spec],
                out_specs=spec,
            ),
            compiler_params=compiler_params,
            # Args are (scale, xr, rr); alias the residual to the output.
            input_output_aliases={2: 0},
        )(scale, xr, rr)

    if padded:
        out = out.reshape(B, rows * lane)[:, :n]
    return out.reshape(orig_shape)


class DropPath:
    """Drop paths (stochastic depth) per sample, applied on a residual branch."""

    def __init__(self, drop_prob=None):
        self.drop_prob = drop_prob

    def __call__(self, x, *, key, training=True, residual=None):
        return drop_path_pallas(x, self.drop_prob or 0.0, training, key,
                                residual=residual)


if __name__ == "__main__":
    key = jax.random.PRNGKey(0)
    k_x, k_r, k_m, k_x2, k_m2, k_x3, k_m3 = jax.random.split(key, 7)

    drop_prob = 0.25
    keep_prob = 1.0 - drop_prob

    # --- Case 1: small NCHW f32, lane-aligned (n = 1024) -------------------
    B, C, H, W = 2, 4, 16, 16
    x = jax.random.normal(k_x, (B, C, H, W), dtype=jnp.float32)

    out = jax.block_until_ready(drop_path_pallas(x, drop_prob, True, k_m))

    u = jax.random.uniform(k_m, (B,), dtype=jnp.float32)
    mask = jnp.floor(keep_prob + u)
    ref = (x / keep_prob) * mask[:, None, None, None]
    assert out.shape == x.shape and out.dtype == x.dtype
    assert jnp.allclose(out, ref, atol=1e-6, rtol=1e-6), "mismatch (plain)"

    # Fused residual-add variant: out = residual + drop_path(x).
    resid = jax.random.normal(k_r, (B, C, H, W), dtype=jnp.float32)
    out_f = jax.block_until_ready(
        drop_path_pallas(x, drop_prob, True, k_m, residual=resid))
    assert jnp.allclose(out_f, resid + ref, atol=1e-5, rtol=1e-5), "mismatch (fused)"

    # --- Case 2: ragged row tiling (rows not a multiple of tile_r), f32 ----
    x2 = jax.random.normal(k_x2, (2, 19, 8, 16), dtype=jnp.float32)  # n = 2432
    out2 = jax.block_until_ready(drop_path_pallas(x2, drop_prob, True, k_m2))
    u2 = jax.random.uniform(k_m2, (2,), dtype=jnp.float32)
    mask2 = jnp.floor(keep_prob + u2)
    ref2 = (x2 / keep_prob) * mask2[:, None, None, None]
    assert jnp.allclose(out2, ref2, atol=1e-6, rtol=1e-6), "mismatch (ragged rows)"

    # --- Case 3: n % 128 != 0 fallback + bf16 in-dtype multiply ------------
    x3 = jax.random.normal(k_x3, (2, 3, 5, 7), dtype=jnp.bfloat16)   # n = 105
    out3 = jax.block_until_ready(drop_path_pallas(x3, drop_prob, True, k_m3))
    u3 = jax.random.uniform(k_m3, (2,), dtype=jnp.float32)
    mask3 = jnp.floor(keep_prob + u3)
    ref3 = (x3.astype(jnp.float32) / keep_prob) * mask3[:, None, None, None]
    assert out3.dtype == jnp.bfloat16
    assert jnp.allclose(out3.astype(jnp.float32), ref3, atol=2e-2, rtol=2e-2), \
        "mismatch (bf16 / padded tail)"

    # Eval path and drop_prob == 0 path: identity.
    assert jnp.array_equal(drop_path_pallas(x, drop_prob, False, k_m), x)
    assert jnp.array_equal(drop_path_pallas(x, 0.0, True, k_m), x)

    print("KERNEL_OK")
</pallas_src>

<mosaic_0001>
module attributes {stable_mosaic.version = 11 : i64} {
  func.func @_drop_path_kernel(%arg0: i32, %arg1: i32, %arg2: memref<2xf32, #tpu.memory_space<smem>>, %arg3: memref<1x2x512xf32, #tpu.memory_space<vmem>>, %arg4: memref<1x2x512xf32, #tpu.memory_space<vmem>>) attributes {dimension_semantics = [#tpu.dimension_semantics<parallel>, #tpu.dimension_semantics<parallel>], iteration_bounds = array<i64: 2, 1>, scalar_prefetch = 1 : i64, scratch_operands = 0 : i64, tpu.core_type = #tpu.core_type<tc>, window_params = [{transform_indices = @transform_0, window_bounds = array<i64: 1, 2, 512>}, {transform_indices = @transform_1, window_bounds = array<i64: 1, 2, 512>}]} {
    %0 = arith.index_cast %arg0 : i32 to index
    %1 = memref.load %arg2[%0] : memref<2xf32, #tpu.memory_space<smem>>
    %c0 = arith.constant 0 : index
    %c0_0 = arith.constant 0 : index
    %c0_1 = arith.constant 0 : index
    %2 = vector.load %arg3[%c0, %c0_0, %c0_1] : memref<1x2x512xf32, #tpu.memory_space<vmem>>, vector<1x2x512xf32>
    %3 = vector.broadcast %1 : f32 to vector<1x2x512xf32>
    %4 = arith.mulf %2, %3 : vector<1x2x512xf32>
    %c0_2 = arith.constant 0 : index
    %c0_3 = arith.constant 0 : index
    %c0_4 = arith.constant 0 : index
    %5 = vector.load %arg4[%c0_2, %c0_3, %c0_4] : memref<1x2x512xf32, #tpu.memory_space<vmem>>, vector<1x2x512xf32>
    tpu.vector_store %arg4[%c0_2, %c0_3, %c0_4], %4 {strides = array<i32>} : memref<1x2x512xf32, #tpu.memory_space<vmem>>, vector<1x2x512xf32>,
    return
  }
  func.func @transform_0(%arg0: i32, %arg1: i32, %arg2: memref<2xf32, #tpu.memory_space<smem>>) -> (i32, i32, i32) {
    %c0_i32 = arith.constant 0 : i32
    %c0_i32_0 = arith.constant 0 : i32
    return %arg0, %arg1, %c0_i32 : i32, i32, i32
  }
  func.func @transform_1(%arg0: i32, %arg1: i32, %arg2: memref<2xf32, #tpu.memory_space<smem>>) -> (i32, i32, i32) {
    %c0_i32 = arith.constant 0 : i32
    %c0_i32_0 = arith.constant 0 : i32
    return %arg0, %arg1, %c0_i32 : i32, i32, i32
  }
}

</mosaic_0001>

<llo_original>
// kernel: tpu_custom_call.1
$region0: #{tpu_custom_call.1}
  #allocation0 [shape = 'u32[]', space=smem, size = 0x4, offset = 0x4, fixed_abs, tag = 'smem constant byte address 0x4 - core index']
  #allocation1 [shape = 'u32[144,128]{1,0:T(1,128)}', space=vmem, size = 0x12000, scoped, tag = 'internal scratch']
  #allocation2 [shape = 's32[1]{0}', space=sflag, size = 0x4, scoped, tag = 'scoped memory for tpu_custom_call.1']
  #allocation3 [shape = 'u8[512]{0}', space=smem, size = 0x200, scoped, tag = 'prefetched SMEM operand 0']
  %s0 = inlined_call_operand.vmem [shape: f32[2], index: 0, kind: input, shape index: {}]
  %s1 = inlined_call_operand.hbm [shape: f32[2,2,512], index: 1, kind: input, shape index: {}, may-alias: {1,2}]
  %s2 = inlined_call_operand.hbm [shape: f32[2,2,512], index: 2, kind: output, shape index: {}, may-alias: {1,2}]
  %s3 = sld [smem:[#allocation0]]
  $region41: #{tpu_custom_call.1} parent=0
    _
  %s5 = ssub.s32 1, %s3
  %s6 = scalar_select 0, %s5, %s3
  %s7 = sshll.u32 %s0, 4
  %s8 = int_to_ptr.vmem [resolvable:$true] %s7
  %10 = dma.vmem_to_smem %s8, 16, [#allocation3], [#allocation2]
  %11 = dma.done [#allocation2], 16
  %12 = sfence
  $region1: #{tpu_custom_call.1} parent=0
    #allocation4 [shape = 'u8[8192]{0}', space=vmem, size = 0x2000, scoped, tag = 'input window, operand 1']
    #allocation5 [shape = 's32[2]{0}', space=sflag, size = 0x8, scoped, tag = 'scoped memory for tpu_custom_call.1']
    #allocation6 [shape = 's32[2]{0}', space=sflag, size = 0x8, scoped, tag = 'scoped memory for tpu_custom_call.1']
    #allocation7 [shape = 'u8[8192]{0}', space=vmem, size = 0x2000, scoped, tag = 'output window, operand 0']
    %13 = vsyncpa [#allocation5], 0
    %s14 = scalar_lea.sflag [#allocation5], 1
    %15 = vsyncpa %s14, 0
    %16 = vsyncpa [#allocation6], 0
    %s17 = scalar_lea.sflag [#allocation6], 1
    %18 = vsyncpa %s17, 0
    loop: start=0, step=1, limit=4
    $region2: #{tpu_custom_call.1} parent=1 // loop_pre_header
      _
    $region3: #{tpu_custom_call.1} parent=1 // loop_header
      %s20 = sphi 0, %s24
      %p21 = scmp.ge.s32.totalorder %s20, 4
      %s27 = sphi 0, %s39
      %s28 = sphi 0, %s35
      %s29 = sphi 0, %s27
      %s30 = sphi 0, %s28
      %s31 = sphi 0, %s29
      %s32 = sphi 0, %s30
      %s44 = sphi 0, %s46
      %s47 = sphi 0, %s44
      %s48 = sphi 0, %s47
      %s64 = sphi 0, %s48
      %s72 = sphi 0, %s74
      %s75 = sphi 0, %s72
      %s76 = sphi 0, %s75
      %s92 = sphi 0, %s76
    $region4: #{tpu_custom_call.1} parent=1 // loop_header_branch
      %23 = sbr.rel (%p21) target = $region8
    $region5: #{tpu_custom_call.1} parent=1 // loop_body
      %s25 = ssub.s32 %s20, 1
      %s26 = ssub.s32 %s20, 2
      %s33 = sadd.s32 1, %s28
      %p34 = scmp.ge.s32.totalorder %s33, 1
      %s35 = scalar_select %p34, 0, %s33
      %s36 = sadd.s32 1, %s27
      %s37 = scalar_select %p34, %s36, %s27
      %p38 = scmp.ge.s32.totalorder %s37, 2
      %s39 = scalar_select %p38, 0, %s37
      %s40 = ssub.s32 %s27, %s39
      %s41 = ssub.s32 %s28, %s35
      %s42 = sor.u32 %s40, %s41
      %p43 = scmp.eq.s32.totalorder %s42, 0
      %s45 = sadd.s32 %s44, 1
      %s46 = scalar_select %p43, %s44, %s45
      %p49 = pneg %p43
      %p50 = scmp.eq.s32.totalorder %s20, 1
      %p51 = por %p49, %p50
      %p52 = scmp.ne.s32.totalorder %s44, %s47
      %p53 = scmp.eq.s32.totalorder %s20, 0
      %p54 = por %p52, %p53
      %p55 = scmp.ne.s32.totalorder %s44, %s47
      %p56 = scmp.eq.s32.totalorder %s25, 1
      %p57 = por %p55, %p56
      %p58 = scmp.ne.s32.totalorder %s47, %s48
      %p59 = scmp.eq.s32.totalorder %s25, 0
      %p60 = por %p58, %p59
      %p61 = scmp.ne.s32.totalorder %s47, %s48
      %p62 = scmp.eq.s32.totalorder %s26, 1
      %p63 = por %p61, %p62
      %p65 = scmp.ne.s32.totalorder %s48, %s64
      %p66 = scmp.eq.s32.totalorder %s26, 0
      %p67 = por %p65, %p66
      %s68 = ssub.s32 %s27, %s39
      %s69 = ssub.s32 %s28, %s35
      %s70 = sor.u32 %s68, %s69
      %p71 = scmp.eq.s32.totalorder %s70, 0
      %s73 = sadd.s32 %s72, 1
      %s74 = scalar_select %p71, %s72, %s73
      %p77 = pneg %p71
      %p78 = scmp.eq.s32.totalorder %s20, 1
      %p79 = por %p77, %p78
      %p80 = scmp.ne.s32.totalorder %s72, %s75
      %p81 = scmp.eq.s32.totalorder %s20, 0
      %p82 = por %p80, %p81
      %p83 = scmp.ne.s32.totalorder %s72, %s75
      %p84 = scmp.eq.s32.totalorder %s25, 1
      %p85 = por %p83, %p84
      %p86 = scmp.ne.s32.totalorder %s75, %s76
      %p87 = scmp.eq.s32.totalorder %s25, 0
      %p88 = por %p86, %p87
      %p89 = scmp.ne.s32.totalorder %s75, %s76
      %p90 = scmp.eq.s32.totalorder %s26, 1
      %p91 = por %p89, %p90
      %p93 = scmp.ne.s32.totalorder %s76, %s92
      %p94 = scmp.eq.s32.totalorder %s26, 0
      %p95 = por %p93, %p94
      %p96 = scmp.le.s32.totalorder 1, %s20
      %p97 = scmp.lt.s32.totalorder %s20, 3
      %p98 = pnand %p96, %p97
      %p99 = pneg %p98
      // Predicated region
      $region9: #{tpu_custom_call.1} parent=5 // pred_check
        _
      $region10: #{tpu_custom_call.1} parent=5 // pred_check_branch
        %101 = sbr.rel (%p98) target = $region12
      $region11: #{tpu_custom_call.1} parent=5 // pred_region
        %s102 = ssub.s32 %s20, 1
      $region12: #{tpu_custom_call.1} parent=5 // pred_fallthru
        _
      %p103 = scmp.lt.s32.totalorder %s20, 2
      // Predicated region
      $region13: #{tpu_custom_call.1} parent=5 // pred_check
        %p104 = pneg %p103
      $region14: #{tpu_custom_call.1} parent=5 // pred_check_branch
        %106 = sbr.rel (%p104) target = $region16
      $region15: #{tpu_custom_call.1} parent=5 // pred_region
        // Predicated region
        $region17: #{tpu_custom_call.1} parent=15 // pred_check
          %p107 = pneg %p54
        $region18: #{tpu_custom_call.1} parent=15 // pred_check_branch
          %109 = sbr.rel (%p107) target = $region20
        $region19: #{tpu_custom_call.1} parent=15 // pred_region
          %s110 = sand.u32 %s44, 1
          %s111 = scalar_lea.sflag [#allocation5], %s110
          %s112 = sand.u32 %s44, 1
          %s113 = smul.addr %s112, 8
          %s114 = scalar_lea.vmem [#allocation4], %s113
          %s116 = ssub.s32 128, 128
          %117 = vsyncadd %s111, %s116
          %s118 = smul.addr %s28, 4
          %s119 = smul.addr %s27, 4
          %s120 = sadd.s32 %s118, %s119
          %s121 = smul.addr %s120, 32
          %s122 = scalar_lea.hbm %s1, %s121
          %s124 = sshll.u32 %s114, 4
          %s125 = int_to_ptr.vmem [resolvable:$true] %s124
          %127 = dma.hbm_to_vmem [thread:$0]  %s122, 128, %s125, %s111
        $region20: #{tpu_custom_call.1} parent=15 // pred_fallthru
          _
      $region16: #{tpu_custom_call.1} parent=5 // pred_fallthru
        _
      %p128 = scmp.le.s32.totalorder 1, %s20
      %p129 = scmp.lt.s32.totalorder %s20, 3
      %p130 = pnand %p128, %p129
      %p131 = pneg %p130
      // Predicated region
      $region21: #{tpu_custom_call.1} parent=5 // pred_check
        _
      $region22: #{tpu_custom_call.1} parent=5 // pred_check_branch
        %133 = sbr.rel (%p130) target = $region24
      $region23: #{tpu_custom_call.1} parent=5 // pred_region
        %s134 = ssub.s32 %s20, 1
        %s135 = sand.u32 %s47, 1
        %s136 = scalar_lea.sflag [#allocation5], %s135
        %s137 = sand.u32 %s47, 1
        %s138 = smul.addr %s137, 8
        %s139 = scalar_lea.vmem [#allocation4], %s138
        // Predicated region
        $region25: #{tpu_custom_call.1} parent=23 // pred_check
          %p140 = pneg %p60
        $region26: #{tpu_custom_call.1} parent=23 // pred_check_branch
          %142 = sbr.rel (%p140) target = $region28
        $region27: #{tpu_custom_call.1} parent=23 // pred_region
          %143 = dma.done %s136, 128
        $region28: #{tpu_custom_call.1} parent=23 // pred_fallthru
          _
        %s144 = sand.u32 %s47, 1
        %s145 = scalar_lea.sflag [#allocation5], %s144
        %s146 = sand.u32 %s47, 1
        %s147 = smul.addr %s146, 8
        %s148 = scalar_lea.vmem [#allocation4], %s147
        %p149 = pneg %p60
        %p150 = pneg %p57
        %p151 = pneg %p88
        %p152 = pneg %p85
        %s153 = sand.u32 %s75, 1
        %s154 = scalar_lea.sflag [#allocation6], %s153
        %s155 = sand.u32 %s75, 1
        %s156 = smul.addr %s155, 8
        %s157 = scalar_lea.vmem [#allocation7], %s156
        %s158 = sld [smem:[#allocation3 + %s29]]
        %v159 = vld [vmem:[%s139] sm:$0xff]
        %v160 = vstv %s158
        %v161 = vmul.f32 %v159, %v160
        %162 = vst [vmem:[%s157] sm:$0xff] %v161
        %s163 = sand.u32 %s75, 1
        %s164 = scalar_lea.sflag [#allocation6], %s163
        %s165 = sand.u32 %s75, 1
        %s166 = smul.addr %s165, 8
        %s167 = scalar_lea.vmem [#allocation7], %s166
        // Predicated region
        $region29: #{tpu_custom_call.1} parent=23 // pred_check
          %p168 = pneg %p85
        $region30: #{tpu_custom_call.1} parent=23 // pred_check_branch
          %170 = sbr.rel (%p168) target = $region32
        $region31: #{tpu_custom_call.1} parent=23 // pred_region
          %s172 = ssub.s32 128, 128
          %173 = vsyncadd %s164, %s172
          %s174 = smul.addr %s30, 4
          %s175 = smul.addr %s29, 4
          %s176 = sadd.s32 %s174, %s175
          %s177 = smul.addr %s176, 32
          %s178 = scalar_lea.hbm %s2, %s177
          %s180 = sshll.u32 %s167, 4
          %s181 = int_to_ptr.vmem [resolvable:$true] %s180
          %183 = dma.vmem_to_hbm [thread:$0]  %s181, 128, %s178, %s164
        $region32: #{tpu_custom_call.1} parent=23 // pred_fallthru
          _
      $region24: #{tpu_custom_call.1} parent=5 // pred_fallthru
        _
      %p184 = scmp.le.s32.totalorder 2, %s20
      // Predicated region
      $region33: #{tpu_custom_call.1} parent=5 // pred_check
        %p185 = pneg %p184
      $region34: #{tpu_custom_call.1} parent=5 // pred_check_branch
        %187 = sbr.rel (%p185) target = $region36
      $region35: #{tpu_custom_call.1} parent=5 // pred_region
        %s188 = ssub.s32 %s20, 2
        // Predicated region
        $region37: #{tpu_custom_call.1} parent=35 // pred_check
          %p189 = pneg %p91
        $region38: #{tpu_custom_call.1} parent=35 // pred_check_branch
          %191 = sbr.rel (%p189) target = $region40
        $region39: #{tpu_custom_call.1} parent=35 // pred_region
          %s192 = sand.u32 %s76, 1
          %s193 = scalar_lea.sflag [#allocation6], %s192
          %s194 = sand.u32 %s76, 1
          %s195 = smul.addr %s194, 8
          %s196 = scalar_lea.vmem [#allocation7], %s195
          %197 = dma.done %s193, 128
        $region40: #{tpu_custom_call.1} parent=35 // pred_fallthru
          _
      $region36: #{tpu_custom_call.1} parent=5 // pred_fallthru
        _
    $region6: #{tpu_custom_call.1} parent=1 // loop_footer
      %s24 = sadd.s32 1, %s20
    $region7: #{tpu_custom_call.1} parent=1 // loop_footer_branch
      %19 = sbr.rel target = $region3
    $region8: #{tpu_custom_call.1} parent=1 // loop_exit
      _
    %198 = vsyncpa [#allocation5], 1
    %s199 = scalar_lea.sflag [#allocation5], 1
    %200 = vsyncpa %s199, 1
    %201 = vsyncpa [#allocation6], 1
    %s202 = scalar_lea.sflag [#allocation6], 1
    %203 = vsyncpa %s202, 1

</llo_original>
